<compile_context>
chip_gen: v6e
topology: v6e:2x2x1
jax: 0.10.0
libtpu: 0.0.40
codegen_flags: <defaults>
</compile_context>

<pallas_src>
import functools

import jax
import jax.numpy as jnp
from jax.experimental import pallas as pl
from jax.experimental.pallas import tpu as pltpu

_NEG_INF = -1e30  # mask value for non-edges (avoids -inf NaNs in flash update)


# --------------------------------------------------------------------------
# Kernel 1: linear projection + per-node attention logits
# --------------------------------------------------------------------------
def _project_kernel(x_ref, w_ref, a_ref, h_ref, logit_ref):
    # x_ref : [TR, F_in],  w_ref : [F_in, H*C],  a_ref : [H*C, 2H]
    h = jnp.dot(x_ref[...], w_ref[...], preferred_element_type=jnp.float32)
    h_ref[...] = h
    # logits columns [0:H] = <h, a_src_h>, [H:2H] = <h, a_dst_h>
    logit_ref[...] = jnp.dot(h, a_ref[...], preferred_element_type=jnp.float32)


def _project(x, w, a_cat, *, tile_rows):
    n_pad, f_in = x.shape
    hc = w.shape[1]
    two_h = a_cat.shape[1]
    flops = 2 * n_pad * f_in * hc + 2 * n_pad * hc * two_h
    return pl.pallas_call(
        _project_kernel,
        out_shape=(jax.ShapeDtypeStruct((n_pad, hc), jnp.float32),
                   jax.ShapeDtypeStruct((n_pad, two_h), jnp.float32)),
        grid_spec=pltpu.PrefetchScalarGridSpec(
            num_scalar_prefetch=0,
            grid=(n_pad // tile_rows,),
            in_specs=[pl.BlockSpec((tile_rows, f_in), lambda i: (i, 0)),
                      pl.BlockSpec((f_in, hc), lambda i: (0, 0)),
                      pl.BlockSpec((hc, two_h), lambda i: (0, 0))],
            out_specs=(pl.BlockSpec((tile_rows, hc), lambda i: (i, 0)),
                       pl.BlockSpec((tile_rows, two_h), lambda i: (i, 0)))),
        compiler_params=pltpu.CompilerParams(
            dimension_semantics=("parallel",),
            vmem_limit_bytes=32 * 1024 * 1024),
        cost_estimate=pl.CostEstimate(
            flops=int(flops),
            transcendentals=0,
            bytes_accessed=int(4 * (x.size + w.size + a_cat.size
                                    + n_pad * (hc + two_h)))),
    )(x, w, a_cat)


# --------------------------------------------------------------------------
# Kernel 2: flash-style masked softmax + message aggregation
# --------------------------------------------------------------------------
def _gat_attn_kernel(adj_ref, src_t_ref, dst_ref, h_ref, bias_ref,
                     out_ref, m_out_ref, l_out_ref,
                     m_sc, l_sc, acc_sc, *,
                     heads, out_ch, negative_slope, apply_relu):
    """One (row-tile, col-tile) step of the online softmax.

    adj_ref   : [TI, TJ] bf16 0/1 mask (adj[i, j] = edge j -> i)
    src_t_ref : [heads, TJ]  source-node logits (transposed / lane-major)
    dst_ref   : [TI, heads]  target-node logits
    h_ref     : [TJ, heads*out_ch] projected source features
    bias_ref  : [1, heads*out_ch]
    out_ref   : [TI, heads*out_ch]   (resident across the col-tile axis)
    m/l_out   : [TI, heads] row max / row sum statistics of the softmax
    """
    j = pl.program_id(1)

    @pl.when(j == 0)
    def _():
        m_sc[...] = jnp.full_like(m_sc, _NEG_INF)
        l_sc[...] = jnp.zeros_like(l_sc)
        acc_sc[...] = jnp.zeros_like(acc_sc)

    edge_mask = adj_ref[...] > 0                              # [TI, TJ]

    for hd in range(heads):                                   # static unroll
        dst_col = dst_ref[:, hd:hd + 1]                       # [TI, 1]
        src_row = src_t_ref[hd:hd + 1, :]                     # [1, TJ]
        e = dst_col + src_row                                 # [TI, TJ]
        e = jnp.where(e > 0, e, negative_slope * e)           # LeakyReLU (VPU)
        e = jnp.where(edge_mask, e, _NEG_INF)                 # mask non-edges

        m_prev = m_sc[:, hd:hd + 1]                           # [TI, 1]
        m_new = jnp.maximum(m_prev, jnp.max(e, axis=-1, keepdims=True))
        scale = jnp.exp(m_prev - m_new)                       # [TI, 1]
        p = jnp.exp(e - m_new)                                # [TI, TJ]

        l_sc[:, hd:hd + 1] = (scale * l_sc[:, hd:hd + 1]
                              + jnp.sum(p, axis=-1, keepdims=True))
        acc_prev = acc_sc[:, hd * out_ch:(hd + 1) * out_ch]
        msg = jnp.dot(p, h_ref[:, hd * out_ch:(hd + 1) * out_ch],
                      preferred_element_type=jnp.float32)     # MXU
        acc_sc[:, hd * out_ch:(hd + 1) * out_ch] = scale * acc_prev + msg
        m_sc[:, hd:hd + 1] = m_new

    @pl.when(j == pl.num_programs(1) - 1)
    def _():
        inv_l = pl.reciprocal(l_sc[...], approx=True)         # [TI, heads] (EUP)
        outs = []
        for hd in range(heads):
            outs.append(acc_sc[:, hd * out_ch:(hd + 1) * out_ch]
                        * inv_l[:, hd:hd + 1])
        result = outs[0] if heads == 1 else jnp.concatenate(outs, axis=-1)
        result = result + bias_ref[...]
        if apply_relu:
            result = jnp.maximum(result, 0.0)
        out_ref[...] = result          # single lane-dense store
        m_out_ref[...] = m_sc[...]
        l_out_ref[...] = l_sc[...]


def _attention(adj, src_t, dst, h, bias, *, heads, out_ch, apply_relu,
               tile_i, tile_j):
    n_pad = adj.shape[0]
    hc = heads * out_ch
    grid = (n_pad // tile_i, n_pad // tile_j)
    kernel = functools.partial(_gat_attn_kernel, heads=heads, out_ch=out_ch,
                               negative_slope=0.2, apply_relu=apply_relu)
    flops = heads * (2 * n_pad * n_pad * out_ch + 8 * n_pad * n_pad)
    bytes_accessed = (adj.size * adj.dtype.itemsize
                      + 4 * (src_t.size + dst.size + h.size * grid[0]
                             + n_pad * (hc + 4 * heads)))
    return pl.pallas_call(
        kernel,
        out_shape=(jax.ShapeDtypeStruct((n_pad, hc), jnp.float32),
                   jax.ShapeDtypeStruct((n_pad, heads), jnp.float32),
                   jax.ShapeDtypeStruct((n_pad, heads), jnp.float32)),
        grid_spec=pltpu.PrefetchScalarGridSpec(
            num_scalar_prefetch=0,
            grid=grid,
            in_specs=[pl.BlockSpec((tile_i, tile_j), lambda i, j: (i, j)),
                      pl.BlockSpec((heads, tile_j), lambda i, j: (0, j)),
                      pl.BlockSpec((tile_i, heads), lambda i, j: (i, 0)),
                      pl.BlockSpec((tile_j, hc), lambda i, j: (j, 0)),
                      pl.BlockSpec((1, hc), lambda i, j: (0, 0))],
            out_specs=(pl.BlockSpec((tile_i, hc), lambda i, j: (i, 0)),
                       pl.BlockSpec((tile_i, heads), lambda i, j: (i, 0)),
                       pl.BlockSpec((tile_i, heads), lambda i, j: (i, 0))),
            scratch_shapes=[pltpu.VMEM((tile_i, heads), jnp.float32),
                            pltpu.VMEM((tile_i, heads), jnp.float32),
                            pltpu.VMEM((tile_i, hc), jnp.float32)]),
        compiler_params=pltpu.CompilerParams(
            dimension_semantics=("parallel", "arbitrary"),
            vmem_limit_bytes=32 * 1024 * 1024),
        cost_estimate=pl.CostEstimate(
            flops=int(flops),
            transcendentals=int(heads * n_pad * n_pad),
            bytes_accessed=int(bytes_accessed)),
    )(adj, src_t, dst, h, bias)


# --------------------------------------------------------------------------
# One GATConv (projection kernel + attention kernel)
# --------------------------------------------------------------------------
def gat_conv(x_pad, w, att_src, att_dst, bias, adj, *, heads, out_ch,
             apply_relu, tile_rows=128, tile_i=128, tile_j=128):
    hc = heads * out_ch
    # Combined attention-projection matrix (block structure), so all per-node
    # logits come from ONE lane-dense matmul instead of width-1 MXU dots.
    a_cat = jnp.zeros((hc, 2 * heads), jnp.float32)
    for hd in range(heads):
        a_cat = a_cat.at[hd * out_ch:(hd + 1) * out_ch, hd].set(att_src[hd])
        a_cat = a_cat.at[hd * out_ch:(hd + 1) * out_ch, heads + hd].set(att_dst[hd])

    h, logits = _project(x_pad, w, a_cat, tile_rows=tile_rows)
    src_t = jnp.transpose(logits[:, :heads])   # [heads, N_pad] (tiny glue)
    dst = logits[:, heads:]                    # [N_pad, heads]

    out, m, l = _attention(adj, src_t, dst, h, bias.reshape(1, -1),
                           heads=heads, out_ch=out_ch, apply_relu=apply_relu,
                           tile_i=tile_i, tile_j=tile_j)
    return out, logits, m, l


# --------------------------------------------------------------------------
# GATLayer forward: relu(conv1(x)) -> conv2 with attention weights
# --------------------------------------------------------------------------
def gat_layer_forward(x, edge_index, params, *, heads, hidden_channels,
                      out_channels, tile=128):
    """Matches GATLayer.forward: returns ((edge_index_with_self_loops, alpha), x_out)."""
    n = x.shape[0]
    n_pad = ((max(n, tile) + tile - 1) // tile) * tile

    # add_self_loops=True (input edge_index assumed self-loop free, matching
    # PyG's remove_self_loops followed by add_self_loops).
    loops = jnp.arange(n, dtype=edge_index.dtype)
    edge_index_sl = jnp.concatenate(
        [edge_index, jnp.stack([loops, loops])], axis=1)          # [2, E + N]
    src, dst = edge_index_sl[0], edge_index_sl[1]

    # Dense 0/1 adjacency as bf16 (exact, half the HBM/VMEM traffic of f32).
    # TODO(synk): replace with CSR + scalar-prefetch tile skipping for very sparse graphs.
    adj = jnp.zeros((n_pad, n_pad), jnp.bfloat16).at[dst, src].set(1.0)
    x_pad = jnp.zeros((n_pad, x.shape[1]), jnp.float32).at[:n].set(x)

    # conv1 (+ ReLU fused into the kernel epilogue); its softmax stats/logits
    # are never written densely and its alpha is never materialized.
    h1, _, _, _ = gat_conv(
        x_pad, params["W1"], params["att_src1"], params["att_dst1"],
        params["b1"], adj, heads=heads, out_ch=hidden_channels,
        apply_relu=True)

    # conv2 (heads=1, return_attention_weights=True)
    h2, logits2, m2, l2 = gat_conv(
        h1, params["W2"], params["att_src2"], params["att_dst2"],
        params["b2"], adj, heads=1, out_ch=out_channels, apply_relu=False)

    # Per-edge attention weights for conv2 reconstructed from per-node
    # quantities in O(E) — no dense [N, N] alpha writeback or gather.
    e = logits2[dst, 1] + logits2[src, 0]          # dst logit + src logit
    e = jnp.where(e > 0, e, 0.2 * e)               # LeakyReLU(0.2)
    alpha_edges = (jnp.exp(e - m2[dst, 0]) / l2[dst, 0])[:, None]  # [E+N, 1]

    return (edge_index_sl, alpha_edges), h2[:n]


def _glorot(key, shape):
    fan_in, fan_out = shape[0], shape[-1]
    lim = (6.0 / (fan_in + fan_out)) ** 0.5
    return jax.random.uniform(key, shape, jnp.float32, -lim, lim)


if __name__ == "__main__":
    N = 16                       # number of nodes
    in_ch, hid_ch, out_ch, heads = 8, 16, 8, 2

    key = jax.random.PRNGKey(0)
    ks = jax.random.split(key, 8)

    x = jax.random.normal(ks[0], (N, in_ch), jnp.float32)

    # Deterministic ring graph (both directions), no self loops.
    idx = jnp.arange(N, dtype=jnp.int32)
    src = jnp.concatenate([idx, (idx + 1) % N])
    dst = jnp.concatenate([(idx + 1) % N, idx])
    edge_index = jnp.stack([src, dst])                      # [2, 2N]

    params = {
        "W1": _glorot(ks[1], (in_ch, heads * hid_ch)),
        "att_src1": _glorot(ks[2], (heads, hid_ch)),
        "att_dst1": _glorot(ks[3], (heads, hid_ch)),
        "b1": jnp.zeros((heads * hid_ch,), jnp.float32),
        "W2": _glorot(ks[4], (heads * hid_ch, out_ch)),
        "att_src2": _glorot(ks[5], (1, out_ch)),
        "att_dst2": _glorot(ks[6], (1, out_ch)),
        "b2": jnp.zeros((out_ch,), jnp.float32),
    }

    (ei_sl, alpha), out = gat_layer_forward(
        x, edge_index, params, heads=heads, hidden_channels=hid_ch,
        out_channels=out_ch)

    jax.block_until_ready((ei_sl, alpha, out))
    assert out.shape == (N, out_ch)
    assert ei_sl.shape == (2, edge_index.shape[1] + N)
    assert alpha.shape == (edge_index.shape[1] + N, 1)
    assert bool(jnp.all(jnp.isfinite(out)))
    assert bool(jnp.all(jnp.isfinite(alpha)))
    # attention coefficients for each target node sum to 1 over its in-edges
    row_sum = jnp.zeros((N,), jnp.float32).at[ei_sl[1]].add(alpha[:, 0])
    assert bool(jnp.all(jnp.abs(row_sum - 1.0) < 1e-3))
    print("KERNEL_OK")
</pallas_src>

<mosaic_0001>
module attributes {stable_mosaic.version = 11 : i64} {
  func.func @_project_kernel(%arg0: i32, %arg1: memref<128x8xf32, #tpu.memory_space<vmem>>, %arg2: memref<8x32xf32, #tpu.memory_space<vmem>>, %arg3: memref<32x4xf32, #tpu.memory_space<vmem>>, %arg4: memref<128x32xf32, #tpu.memory_space<vmem>>, %arg5: memref<128x4xf32, #tpu.memory_space<vmem>>) attributes {dimension_semantics = [#tpu.dimension_semantics<parallel>], iteration_bounds = array<i64: 1>, scalar_prefetch = 0 : i64, scratch_operands = 0 : i64, tpu.core_type = #tpu.core_type<tc>, window_params = [{transform_indices = @transform_0, window_bounds = array<i64: 128, 8>}, {pipeline_mode = #tpu.pipeline_mode<synchronous>, transform_indices = @transform_1, window_bounds = array<i64: 8, 32>}, {pipeline_mode = #tpu.pipeline_mode<synchronous>, transform_indices = @transform_2, window_bounds = array<i64: 32, 4>}, {transform_indices = @transform_3, window_bounds = array<i64: 128, 32>}, {transform_indices = @transform_4, window_bounds = array<i64: 128, 4>}]} {
    %c0 = arith.constant 0 : index
    %c0_0 = arith.constant 0 : index
    %0 = vector.load %arg1[%c0, %c0_0] : memref<128x8xf32, #tpu.memory_space<vmem>>, vector<128x8xf32>
    %c0_1 = arith.constant 0 : index
    %c0_2 = arith.constant 0 : index
    %1 = vector.load %arg2[%c0_1, %c0_2] : memref<8x32xf32, #tpu.memory_space<vmem>>, vector<8x32xf32>
    %cst = arith.constant dense<0.000000e+00> : vector<128x32xf32>
    %2 = tpu.matmul %0, %1, %cst {dimension_numbers = #tpu.dot_dimension_numbers<[1], [0], [0], [1], [0, 0, 1, 1], [], []>} : vector<128x8xf32>, vector<8x32xf32>, vector<128x32xf32> -> vector<128x32xf32>
    %c0_3 = arith.constant 0 : index
    %c0_4 = arith.constant 0 : index
    %3 = vector.load %arg4[%c0_3, %c0_4] : memref<128x32xf32, #tpu.memory_space<vmem>>, vector<128x32xf32>
    tpu.vector_store %arg4[%c0_3, %c0_4], %2 {strides = array<i32>} : memref<128x32xf32, #tpu.memory_space<vmem>>, vector<128x32xf32>,
    %c0_5 = arith.constant 0 : index
    %c0_6 = arith.constant 0 : index
    %4 = vector.load %arg3[%c0_5, %c0_6] : memref<32x4xf32, #tpu.memory_space<vmem>>, vector<32x4xf32>
    %cst_7 = arith.constant dense<0.000000e+00> : vector<128x4xf32>
    %5 = tpu.matmul %2, %4, %cst_7 {dimension_numbers = #tpu.dot_dimension_numbers<[1], [0], [0], [1], [0, 0, 1, 1], [], []>} : vector<128x32xf32>, vector<32x4xf32>, vector<128x4xf32> -> vector<128x4xf32>
    %c0_8 = arith.constant 0 : index
    %c0_9 = arith.constant 0 : index
    %6 = vector.load %arg5[%c0_8, %c0_9] : memref<128x4xf32, #tpu.memory_space<vmem>>, vector<128x4xf32>
    tpu.vector_store %arg5[%c0_8, %c0_9], %5 {strides = array<i32>} : memref<128x4xf32, #tpu.memory_space<vmem>>, vector<128x4xf32>,
    return
  }
  func.func @transform_0(%arg0: i32) -> (i32, i32) {
    %c0_i32 = arith.constant 0 : i32
    %c0_i32_0 = arith.constant 0 : i32
    return %arg0, %c0_i32 : i32, i32
  }
  func.func @transform_1(%arg0: i32) -> (i32, i32) {
    %c0_i32 = arith.constant 0 : i32
    %c0_i32_0 = arith.constant 0 : i32
    %c0_i32_1 = arith.constant 0 : i32
    return %c0_i32, %c0_i32_0 : i32, i32
  }
  func.func @transform_2(%arg0: i32) -> (i32, i32) {
    %c0_i32 = arith.constant 0 : i32
    %c0_i32_0 = arith.constant 0 : i32
    %c0_i32_1 = arith.constant 0 : i32
    return %c0_i32, %c0_i32_0 : i32, i32
  }
  func.func @transform_3(%arg0: i32) -> (i32, i32) {
    %c0_i32 = arith.constant 0 : i32
    %c0_i32_0 = arith.constant 0 : i32
    return %arg0, %c0_i32 : i32, i32
  }
  func.func @transform_4(%arg0: i32) -> (i32, i32) {
    %c0_i32 = arith.constant 0 : i32
    %c0_i32_0 = arith.constant 0 : i32
    return %arg0, %c0_i32 : i32, i32
  }
}

</mosaic_0001>

<llo_original>
// kernel: tpu_custom_call.1
$region0: #{tpu_custom_call.1}
  #allocation0 [shape = 'u32[]', space=smem, size = 0x4, offset = 0x4, fixed_abs, tag = 'smem constant byte address 0x4 - core index']
  #allocation1 [shape = 'u32[144,128]{1,0:T(1,128)}', space=vmem, size = 0x12000, scoped, tag = 'internal scratch']
  %s0 = inlined_call_operand.vmem [shape: f32[128,8], index: 0, kind: input, shape index: {}]
  %s1 = inlined_call_operand.vmem [shape: f32[8,32], index: 1, kind: input, shape index: {}]
  %s2 = inlined_call_operand.vmem [shape: f32[32,4], index: 2, kind: input, shape index: {}]
  %s3 = inlined_call_operand.vmem [shape: f32[128,32], index: 3, kind: output, shape index: {0}]
  %s4 = inlined_call_operand.vmem [shape: f32[128,4], index: 4, kind: output, shape index: {1}]
  %5 = xla_tuple %s3, %s4
  %s6 = sld [smem:[#allocation0]]
  $region30: #{tpu_custom_call.1} parent=0
    _
  %s8 = ssub.s32 1, %s6
  %s9 = scalar_select 0, %s8, %s6
  // Predicated region
  $region2: #{tpu_custom_call.1} parent=0 // pred_check
    _
  $region3: #{tpu_custom_call.1} parent=0 // pred_check_branch
    %11 = sbr.rel (0) target = $region5
  $region4: #{tpu_custom_call.1} parent=0 // pred_region
    _
  $region5: #{tpu_custom_call.1} parent=0 // pred_fallthru
    _
  // Predicated region
  $region6: #{tpu_custom_call.1} parent=0 // pred_check
    _
  $region7: #{tpu_custom_call.1} parent=0 // pred_check_branch
    %13 = sbr.rel (0) target = $region9
  $region8: #{tpu_custom_call.1} parent=0 // pred_region
    _
  $region9: #{tpu_custom_call.1} parent=0 // pred_fallthru
    _
  // Predicated region
  $region10: #{tpu_custom_call.1} parent=0 // pred_check
    _
  $region11: #{tpu_custom_call.1} parent=0 // pred_check_branch
    %15 = sbr.rel (0) target = $region13
  $region12: #{tpu_custom_call.1} parent=0 // pred_region
    _
  $region13: #{tpu_custom_call.1} parent=0 // pred_fallthru
    _
  %v16 = vld [vmem:[%s0] sm:$0xff]
  %v17 = vld [vmem:[%s0 + $0x8] sm:$0xff]
  %v18 = vld [vmem:[%s0 + $0x10] sm:$0xff]
  %v19 = vld [vmem:[%s0 + $0x18] sm:$0xff]
  %v20 = vld [vmem:[%s0 + $0x20] sm:$0xff]
  %v21 = vld [vmem:[%s0 + $0x28] sm:$0xff]
  %v22 = vld [vmem:[%s0 + $0x30] sm:$0xff]
  %v23 = vld [vmem:[%s0 + $0x38] sm:$0xff]
  %v24 = vld [vmem:[%s0 + $0x40] sm:$0xff]
  %v25 = vld [vmem:[%s0 + $0x48] sm:$0xff]
  %v26 = vld [vmem:[%s0 + $0x50] sm:$0xff]
  %v27 = vld [vmem:[%s0 + $0x58] sm:$0xff]
  %v28 = vld [vmem:[%s0 + $0x60] sm:$0xff]
  %v29 = vld [vmem:[%s0 + $0x68] sm:$0xff]
  %v30 = vld [vmem:[%s0 + $0x70] sm:$0xff]
  %v31 = vld [vmem:[%s0 + $0x78] sm:$0xff]
  %v32 = vld [vmem:[%s1] sm:$0xff]
  %vm33 = vcmask 64512
  %v35 = vsel %vm33, %v16, 0
  %v38 = vsel %vm33, %v17, 0
  %v41 = vsel %vm33, %v18, 0
  %v44 = vsel %vm33, %v19, 0
  %v47 = vsel %vm33, %v20, 0
  %v50 = vsel %vm33, %v21, 0
  %v53 = vsel %vm33, %v22, 0
  %v56 = vsel %vm33, %v23, 0
  %v59 = vsel %vm33, %v24, 0
  %v62 = vsel %vm33, %v25, 0
  %v65 = vsel %vm33, %v26, 0
  %v68 = vsel %vm33, %v27, 0
  %v71 = vsel %vm33, %v28, 0
  %v74 = vsel %vm33, %v29, 0
  %v77 = vsel %vm33, %v30, 0
  %v80 = vsel %vm33, %v31, 0
  %82 = vmatprep.subr.mxu0 0.0
  %83 = vmatpush1.msra.mxu0 0.0
  %84 = vmatprep.subr.mxu0 0.0
  %85 = vmatpush1.msra.mxu0 0.0
  %86 = vmatprep.subr.mxu0 0.0
  %87 = vmatpush1.msra.mxu0 0.0
  %88 = vmatprep.subr.mxu0 0.0
  %89 = vmatpush1.msra.mxu0 0.0
  %90 = vmatprep.subr.mxu0 0.0
  %91 = vmatpush1.msra.mxu0 0.0
  %92 = vmatprep.subr.mxu0 0.0
  %93 = vmatpush1.msra.mxu0 0.0
  %94 = vmatprep.subr.mxu0 0.0
  %95 = vmatpush1.msra.mxu0 0.0
  %96 = vmatprep.subr.mxu0 0.0
  %97 = vmatpush1.msra.mxu0 0.0
  %98 = vmatprep.subr.mxu0 0.0
  %99 = vmatpush1.msra.mxu0 0.0
  %100 = vmatprep.subr.mxu0 0.0
  %101 = vmatpush1.msra.mxu0 0.0
  %102 = vmatprep.subr.mxu0 0.0
  %103 = vmatpush1.msra.mxu0 0.0
  %104 = vmatprep.subr.mxu0 0.0
  %105 = vmatpush1.msra.mxu0 0.0
  %106 = vmatprep.subr.mxu0 0.0
  %107 = vmatpush1.msra.mxu0 0.0
  %108 = vmatprep.subr.mxu0 0.0
  %109 = vmatpush1.msra.mxu0 0.0
  %110 = vmatprep.subr.mxu0 0.0
  %111 = vmatpush1.msra.mxu0 0.0
  %112 = vmatprep.subr.mxu0 0.0
  %113 = vmatpush1.msra.mxu0 %v32
  %114 = vmatprep.subr.mxu0 0.0
  %115 = vmatpush2.msra.mxu0 0.0
  %116 = vmatprep.subr.mxu0 0.0
  %117 = vmatpush2.msra.mxu0 0.0
  %118 = vmatprep.subr.mxu0 0.0
  %119 = vmatpush2.msra.mxu0 0.0
  %120 = vmatprep.subr.mxu0 0.0
  %121 = vmatpush2.msra.mxu0 0.0
  %122 = vmatprep.subr.mxu0 0.0
  %123 = vmatpush2.msra.mxu0 0.0
  %124 = vmatprep.subr.mxu0 0.0
  %125 = vmatpush2.msra.mxu0 0.0
  %126 = vmatprep.subr.mxu0 0.0
  %127 = vmatpush2.msra.mxu0 0.0
  %128 = vmatprep.subr.mxu0 0.0
  %129 = vmatpush2.msra.mxu0 0.0
  %130 = vmatprep.subr.mxu0 0.0
  %131 = vmatpush2.msra.mxu0 0.0
  %132 = vmatprep.subr.mxu0 0.0
  %133 = vmatpush2.msra.mxu0 0.0
  %134 = vmatprep.subr.mxu0 0.0
  %135 = vmatpush2.msra.mxu0 0.0
  %136 = vmatprep.subr.mxu0 0.0
  %137 = vmatpush2.msra.mxu0 0.0
  %138 = vmatprep.subr.mxu0 0.0
  %139 = vmatpush2.msra.mxu0 0.0
  %140 = vmatprep.subr.mxu0 0.0
  %141 = vmatpush2.msra.mxu0 0.0
  %142 = vmatprep.subr.mxu0 0.0
  %143 = vmatpush2.msra.mxu0 0.0
  %144 = vmatprep.subr.mxu0 0.0
  %145 = vmatpush2.msra.mxu0 0.0
  %146 = vmatprep.mubr.f32.mxu0 0.0
  %147 = vmatmul.mubr.f32.gmra.mxu0 %v35
  %v148 = vpop.f32.mrf.mxu0
  %v149 = vadd.f32 0.0, %v148
  %v150 = vpop.f32.mrf.mxu0
  %151 = vmatprep.mubr.f32.mxu0 0.0
  %152 = vmatmul.mubr.f32.gmra.mxu0 %v38
  %v153 = vpop.f32.mrf.mxu0
  %v154 = vadd.f32 0.0, %v153
  %v155 = vpop.f32.mrf.mxu0
  %156 = vmatprep.mubr.f32.mxu0 0.0
  %157 = vmatmul.mubr.f32.gmra.mxu0 %v41
  %v158 = vpop.f32.mrf.mxu0
  %v159 = vadd.f32 0.0, %v158
  %v160 = vpop.f32.mrf.mxu0
  %161 = vmatprep.mubr.f32.mxu0 0.0
  %162 = vmatmul.mubr.f32.gmra.mxu0 %v44
  %v163 = vpop.f32.mrf.mxu0
  %v164 = vadd.f32 0.0, %v163
  %v165 = vpop.f32.mrf.mxu0
  %166 = vmatprep.mubr.f32.mxu0 0.0
  %167 = vmatmul.mubr.f32.gmra.mxu0 %v47
  %v168 = vpop.f32.mrf.mxu0
  %v169 = vadd.f32 0.0, %v168
  %v170 = vpop.f32.mrf.mxu0
  %171 = vmatprep.mubr.f32.mxu0 0.0
  %172 = vmatmul.mubr.f32.gmra.mxu0 %v50
  %v173 = vpop.f32.mrf.mxu0
  %v174 = vadd.f32 0.0, %v173
  %v175 = vpop.f32.mrf.mxu0
  %176 = vmatprep.mubr.f32.mxu0 0.0
  %177 = vmatmul.mubr.f32.gmra.mxu0 %v53
  %v178 = vpop.f32.mrf.mxu0
  %v179 = vadd.f32 0.0, %v178
  %v180 = vpop.f32.mrf.mxu0
  %181 = vmatprep.mubr.f32.mxu0 0.0
  %182 = vmatmul.mubr.f32.gmra.mxu0 %v56
  %v183 = vpop.f32.mrf.mxu0
  %v184 = vadd.f32 0.0, %v183
  %v185 = vpop.f32.mrf.mxu0
  %186 = vmatprep.mubr.f32.mxu0 0.0
  %187 = vmatmul.mubr.f32.gmra.mxu0 %v59
  %v188 = vpop.f32.mrf.mxu0
  %v189 = vadd.f32 0.0, %v188
  %v190 = vpop.f32.mrf.mxu0
  %191 = vmatprep.mubr.f32.mxu0 0.0
  %192 = vmatmul.mubr.f32.gmra.mxu0 %v62
  %v193 = vpop.f32.mrf.mxu0
  %v194 = vadd.f32 0.0, %v193
  %v195 = vpop.f32.mrf.mxu0
  %196 = vmatprep.mubr.f32.mxu0 0.0
  %197 = vmatmul.mubr.f32.gmra.mxu0 %v65
  %v198 = vpop.f32.mrf.mxu0
  %v199 = vadd.f32 0.0, %v198
  %v200 = vpop.f32.mrf.mxu0
  %201 = vmatprep.mubr.f32.mxu0 0.0
  %202 = vmatmul.mubr.f32.gmra.mxu0 %v68
  %v203 = vpop.f32.mrf.mxu0
  %v204 = vadd.f32 0.0, %v203
  %v205 = vpop.f32.mrf.mxu0
  %206 = vmatprep.mubr.f32.mxu0 0.0
  %207 = vmatmul.mubr.f32.gmra.mxu0 %v71
  %v208 = vpop.f32.mrf.mxu0
  %v209 = vadd.f32 0.0, %v208
  %v210 = vpop.f32.mrf.mxu0
  %211 = vmatprep.mubr.f32.mxu0 0.0
  %212 = vmatmul.mubr.f32.gmra.mxu0 %v74
  %v213 = vpop.f32.mrf.mxu0
  %v214 = vadd.f32 0.0, %v213
  %v215 = vpop.f32.mrf.mxu0
  %216 = vmatprep.mubr.f32.mxu0 0.0
  %217 = vmatmul.mubr.f32.gmra.mxu0 %v77
  %v218 = vpop.f32.mrf.mxu0
  %v219 = vadd.f32 0.0, %v218
  %v220 = vpop.f32.mrf.mxu0
  %221 = vmatprep.mubr.f32.mxu0 0.0
  %222 = vmatmul.mubr.f32.gmra.mxu0 %v80
  %v223 = vpop.f32.mrf.mxu0
  %v224 = vadd.f32 0.0, %v223
  %v225 = vpop.f32.mrf.mxu0
  %226 = vdwg.mxu0
  %vm227 = vcmask 261120
  %228 = vst.msk [vmem:[%s3] sm:$0xff] %vm227, %v149
  %229 = vst.msk [vmem:[%s3 + $0x8] sm:$0xff] %vm227, %v154
  %230 = vst.msk [vmem:[%s3 + $0x10] sm:$0xff] %vm227, %v159
  %231 = vst.msk [vmem:[%s3 + $0x18] sm:$0xff] %vm227, %v164
  %232 = vst.msk [vmem:[%s3 + $0x20] sm:$0xff] %vm227, %v169
  %233 = vst.msk [vmem:[%s3 + $0x28] sm:$0xff] %vm227, %v174
  %234 = vst.msk [vmem:[%s3 + $0x30] sm:$0xff] %vm227, %v179
  %235 = vst.msk [vmem:[%s3 + $0x38] sm:$0xff] %vm227, %v184
  %236 = vst.msk [vmem:[%s3 + $0x40] sm:$0xff] %vm227, %v189
  %237 = vst.msk [vmem:[%s3 + $0x48] sm:$0xff] %vm227, %v194
  %238 = vst.msk [vmem:[%s3 + $0x50] sm:$0xff] %vm227, %v199
  %239 = vst.msk [vmem:[%s3 + $0x58] sm:$0xff] %vm227, %v204
  %240 = vst.msk [vmem:[%s3 + $0x60] sm:$0xff] %vm227, %v209
  %241 = vst.msk [vmem:[%s3 + $0x68] sm:$0xff] %vm227, %v214
  %242 = vst.msk [vmem:[%s3 + $0x70] sm:$0xff] %vm227, %v219
  %243 = vst.msk [vmem:[%s3 + $0x78] sm:$0xff] %vm227, %v224
  %v244 = vld [vmem:[%s2] sm:$0xff]
  %v245 = vld [vmem:[%s2 + $0x8] sm:$0xff]
  %v246 = vld [vmem:[%s2 + $0x10] sm:$0xff]
  %v247 = vld [vmem:[%s2 + $0x18] sm:$0xff]
  %v249 = vsel %vm227, %v149, 0
  %v252 = vsel %vm227, %v154, 0
  %v255 = vsel %vm227, %v159, 0
  %v258 = vsel %vm227, %v164, 0
  %v261 = vsel %vm227, %v169, 0
  %v264 = vsel %vm227, %v174, 0
  %v267 = vsel %vm227, %v179, 0
  %v270 = vsel %vm227, %v184, 0
  %v273 = vsel %vm227, %v189, 0
  %v276 = vsel %vm227, %v194, 0
  %v279 = vsel %vm227, %v199, 0
  %v282 = vsel %vm227, %v204, 0
  %v285 = vsel %vm227, %v209, 0
  %v288 = vsel %vm227, %v214, 0
  %v291 = vsel %vm227, %v219, 0
  %v294 = vsel %vm227, %v224, 0
  %296 = vmatprep.subr.mxu0 0.0
  %297 = vmatpush1.msra.mxu0 0.0
  %298 = vmatprep.subr.mxu0 0.0
  %299 = vmatpush1.msra.mxu0 0.0
  %300 = vmatprep.subr.mxu0 0.0
  %301 = vmatpush1.msra.mxu0 0.0
  %302 = vmatprep.subr.mxu0 0.0
  %303 = vmatpush1.msra.mxu0 0.0
  %304 = vmatprep.subr.mxu0 0.0
  %305 = vmatpush1.msra.mxu0 0.0
  %306 = vmatprep.subr.mxu0 0.0
  %307 = vmatpush1.msra.mxu0 0.0
  %308 = vmatprep.subr.mxu0 0.0
  %309 = vmatpush1.msra.mxu0 0.0
  %310 = vmatprep.subr.mxu0 0.0
  %311 = vmatpush1.msra.mxu0 0.0
  %312 = vmatprep.subr.mxu0 0.0
  %313 = vmatpush1.msra.mxu0 0.0
  %314 = vmatprep.subr.mxu0 0.0
  %315 = vmatpush1.msra.mxu0 0.0
  %316 = vmatprep.subr.mxu0 0.0
  %317 = vmatpush1.msra.mxu0 0.0
  %318 = vmatprep.subr.mxu0 0.0
  %319 = vmatpush1.msra.mxu0 0.0
  %320 = vmatprep.subr.mxu0 0.0
  %321 = vmatpush1.msra.mxu0 %v247
  %322 = vmatprep.subr.mxu0 0.0
  %323 = vmatpush1.msra.mxu0 %v246
  %324 = vmatprep.subr.mxu0 0.0
  %325 = vmatpush1.msra.mxu0 %v245
  %326 = vmatprep.subr.mxu0 0.0
  %327 = vmatpush1.msra.mxu0 %v244
  %328 = vmatprep.subr.mxu0 0.0
  %329 = vmatpush2.msra.mxu0 0.0
  %330 = vmatprep.subr.mxu0 0.0
  %331 = vmatpush2.msra.mxu0 0.0
  %332 = vmatprep.subr.mxu0 0.0
  %333 = vmatpush2.msra.mxu0 0.0
  %334 = vmatprep.subr.mxu0 0.0
  %335 = vmatpush2.msra.mxu0 0.0
  %336 = vmatprep.subr.mxu0 0.0
  %337 = vmatpush2.msra.mxu0 0.0
  %338 = vmatprep.subr.mxu0 0.0
  %339 = vmatpush2.msra.mxu0 0.0
  %340 = vmatprep.subr.mxu0 0.0
  %341 = vmatpush2.msra.mxu0 0.0
  %342 = vmatprep.subr.mxu0 0.0
  %343 = vmatpush2.msra.mxu0 0.0
  %344 = vmatprep.subr.mxu0 0.0
  %345 = vmatpush2.msra.mxu0 0.0
  %346 = vmatprep.subr.mxu0 0.0
  %347 = vmatpush2.msra.mxu0 0.0
  %348 = vmatprep.subr.mxu0 0.0
  %349 = vmatpush2.msra.mxu0 0.0
  %350 = vmatprep.subr.mxu0 0.0
  %351 = vmatpush2.msra.mxu0 0.0
  %352 = vmatprep.subr.mxu0 0.0
  %353 = vmatpush2.msra.mxu0 0.0
  %354 = vmatprep.subr.mxu0 0.0
  %355 = vmatpush2.msra.mxu0 0.0
  %356 = vmatprep.subr.mxu0 0.0
  %357 = vmatpush2.msra.mxu0 0.0
  %358 = vmatprep.subr.mxu0 0.0
  %359 = vmatpush2.msra.mxu0 0.0
  %360 = vmatprep.mubr.f32.mxu0 0.0
  %361 = vmatmul.mubr.f32.gmra.mxu0 %v249
  %v362 = vpop.f32.mrf.mxu0
  %v363 = vadd.f32 0.0, %v362
  %v364 = vpop.f32.mrf.mxu0
  %365 = vmatprep.mubr.f32.mxu0 0.0
  %366 = vmatmul.mubr.f32.gmra.mxu0 %v252
  %v367 = vpop.f32.mrf.mxu0
  %v368 = vadd.f32 0.0, %v367
  %v369 = vpop.f32.mrf.mxu0
  %370 = vmatprep.mubr.f32.mxu0 0.0
  %371 = vmatmul.mubr.f32.gmra.mxu0 %v255
  %v372 = vpop.f32.mrf.mxu0
  %v373 = vadd.f32 0.0, %v372
  %v374 = vpop.f32.mrf.mxu0
  %375 = vmatprep.mubr.f32.mxu0 0.0
  %376 = vmatmul.mubr.f32.gmra.mxu0 %v258
  %v377 = vpop.f32.mrf.mxu0
  %v378 = vadd.f32 0.0, %v377
  %v379 = vpop.f32.mrf.mxu0
  %380 = vmatprep.mubr.f32.mxu0 0.0
  %381 = vmatmul.mubr.f32.gmra.mxu0 %v261
  %v382 = vpop.f32.mrf.mxu0
  %v383 = vadd.f32 0.0, %v382
  %v384 = vpop.f32.mrf.mxu0
  %385 = vmatprep.mubr.f32.mxu0 0.0
  %386 = vmatmul.mubr.f32.gmra.mxu0 %v264
  %v387 = vpop.f32.mrf.mxu0
  %v388 = vadd.f32 0.0, %v387
  %v389 = vpop.f32.mrf.mxu0
  %390 = vmatprep.mubr.f32.mxu0 0.0
  %391 = vmatmul.mubr.f32.gmra.mxu0 %v267
  %v392 = vpop.f32.mrf.mxu0
  %v393 = vadd.f32 0.0, %v392
  %v394 = vpop.f32.mrf.mxu0
  %395 = vmatprep.mubr.f32.mxu0 0.0
  %396 = vmatmul.mubr.f32.gmra.mxu0 %v270
  %v397 = vpop.f32.mrf.mxu0
  %v398 = vadd.f32 0.0, %v397
  %v399 = vpop.f32.mrf.mxu0
  %400 = vmatprep.mubr.f32.mxu0 0.0
  %401 = vmatmul.mubr.f32.gmra.mxu0 %v273
  %v402 = vpop.f32.mrf.mxu0
  %v403 = vadd.f32 0.0, %v402
  %v404 = vpop.f32.mrf.mxu0
  %405 = vmatprep.mubr.f32.mxu0 0.0
  %406 = vmatmul.mubr.f32.gmra.mxu0 %v276
  %v407 = vpop.f32.mrf.mxu0
  %v408 = vadd.f32 0.0, %v407
  %v409 = vpop.f32.mrf.mxu0
  %410 = vmatprep.mubr.f32.mxu0 0.0
  %411 = vmatmul.mubr.f32.gmra.mxu0 %v279
  %v412 = vpop.f32.mrf.mxu0
  %v413 = vadd.f32 0.0, %v412
  %v414 = vpop.f32.mrf.mxu0
  %415 = vmatprep.mubr.f32.mxu0 0.0
  %416 = vmatmul.mubr.f32.gmra.mxu0 %v282
  %v417 = vpop.f32.mrf.mxu0
  %v418 = vadd.f32 0.0, %v417
  %v419 = vpop.f32.mrf.mxu0
  %420 = vmatprep.mubr.f32.mxu0 0.0
  %421 = vmatmul.mubr.f32.gmra.mxu0 %v285
  %v422 = vpop.f32.mrf.mxu0
  %v423 = vadd.f32 0.0, %v422
  %v424 = vpop.f32.mrf.mxu0
  %425 = vmatprep.mubr.f32.mxu0 0.0
  %426 = vmatmul.mubr.f32.gmra.mxu0 %v288
  %v427 = vpop.f32.mrf.mxu0
  %v428 = vadd.f32 0.0, %v427
  %v429 = vpop.f32.mrf.mxu0
  %430 = vmatprep.mubr.f32.mxu0 0.0
  %431 = vmatmul.mubr.f32.gmra.mxu0 %v291
  %v432 = vpop.f32.mrf.mxu0
  %v433 = vadd.f32 0.0, %v432
  %v434 = vpop.f32.mrf.mxu0
  %435 = vmatprep.mubr.f32.mxu0 0.0
  %436 = vmatmul.mubr.f32.gmra.mxu0 %v294
  %v437 = vpop.f32.mrf.mxu0
  %v438 = vadd.f32 0.0, %v437
  %v439 = vpop.f32.mrf.mxu0
  %440 = vdwg.mxu0
  %vm441 = vcmask 31744
  %442 = vst.msk [vmem:[%s4] sm:$0xff] %vm441, %v363
  %443 = vst.msk [vmem:[%s4 + $0x8] sm:$0xff] %vm441, %v368
  %444 = vst.msk [vmem:[%s4 + $0x10] sm:$0xff] %vm441, %v373
  %445 = vst.msk [vmem:[%s4 + $0x18] sm:$0xff] %vm441, %v378
  %446 = vst.msk [vmem:[%s4 + $0x20] sm:$0xff] %vm441, %v383
  %447 = vst.msk [vmem:[%s4 + $0x28] sm:$0xff] %vm441, %v388
  %448 = vst.msk [vmem:[%s4 + $0x30] sm:$0xff] %vm441, %v393
  %449 = vst.msk [vmem:[%s4 + $0x38] sm:$0xff] %vm441, %v398
  %450 = vst.msk [vmem:[%s4 + $0x40] sm:$0xff] %vm441, %v403
  %451 = vst.msk [vmem:[%s4 + $0x48] sm:$0xff] %vm441, %v408
  %452 = vst.msk [vmem:[%s4 + $0x50] sm:$0xff] %vm441, %v413
  %453 = vst.msk [vmem:[%s4 + $0x58] sm:$0xff] %vm441, %v418
  %454 = vst.msk [vmem:[%s4 + $0x60] sm:$0xff] %vm441, %v423
  %455 = vst.msk [vmem:[%s4 + $0x68] sm:$0xff] %vm441, %v428
  %456 = vst.msk [vmem:[%s4 + $0x70] sm:$0xff] %vm441, %v433
  %457 = vst.msk [vmem:[%s4 + $0x78] sm:$0xff] %vm441, %v438
  // Predicated region
  $region14: #{tpu_custom_call.1} parent=0 // pred_check
    _
  $region15: #{tpu_custom_call.1} parent=0 // pred_check_branch
    %459 = sbr.rel (0) target = $region17
  $region16: #{tpu_custom_call.1} parent=0 // pred_region
    _
  $region17: #{tpu_custom_call.1} parent=0 // pred_fallthru
    _
  // Predicated region
  $region18: #{tpu_custom_call.1} parent=0 // pred_check
    _
  $region19: #{tpu_custom_call.1} parent=0 // pred_check_branch
    %461 = sbr.rel (0) target = $region21
  $region20: #{tpu_custom_call.1} parent=0 // pred_region
    _
  $region21: #{tpu_custom_call.1} parent=0 // pred_fallthru
    _
  // Predicated region
  $region22: #{tpu_custom_call.1} parent=0 // pred_check
    _
  $region23: #{tpu_custom_call.1} parent=0 // pred_check_branch
    %463 = sbr.rel (0) target = $region25
  $region24: #{tpu_custom_call.1} parent=0 // pred_region
    _
  $region25: #{tpu_custom_call.1} parent=0 // pred_fallthru
    _
  // Predicated region
  $region26: #{tpu_custom_call.1} parent=0 // pred_check
    _
  $region27: #{tpu_custom_call.1} parent=0 // pred_check_branch
    %465 = sbr.rel (0) target = $region29
  $region28: #{tpu_custom_call.1} parent=0 // pred_region
    _
  $region29: #{tpu_custom_call.1} parent=0 // pred_fallthru
    _

</llo_original>
